<compile_context>
chip_gen: v7x
topology: tpu7x:2x2x1
jax: 0.10.0
libtpu: 0.0.40
codegen_flags: <defaults>
</compile_context>

<pallas_src>
import jax
import jax.numpy as jnp
import numpy as np
from jax import lax
from jax.experimental import pallas as pl
from jax.experimental.pallas import tpu as pltpu


def _round_up(x, m):
    return ((x + m - 1) // m) * m


def _deconv_block_kernel(p_ref, w_ref, b_ref, a_ref, o_ref):
    # MXU: (tm, K) bf16 @ (K, N) bf16 -> f32 accumulate.
    y = jnp.dot(p_ref[...], w_ref[...], preferred_element_type=jnp.float32)
    y = y + b_ref[...]                     # (1, N) f32 bias broadcast (VPU)
    alpha = a_ref[0]                       # scalar PReLU slope from SMEM
    # f32 epilogue, cast only at the final store (v5e-friendly).
    o_ref[...] = jnp.where(y > 0, y, alpha * y).astype(o_ref.dtype)


def deconv_block_forward(x, weight, bias, prelu_alpha, *,
                         kernel_size=6, stride=2, padding=2,
                         tm=1024, compute_dtype=jnp.bfloat16,
                         out_dtype=jnp.float32):
    """PReLU(ConvTranspose2d(x)) for the stride-2 / padding=k/2-1 family.

    x:      (B, Cin, H, W)        NCHW (PyTorch layout)
    weight: (Cin, Cout, k, k)     PyTorch ConvTranspose2d weight layout
    bias:   (Cout,)
    prelu_alpha: scalar (single-parameter PReLU, PyTorch default init 0.25)
    returns (B, Cout, 2H, 2W)  float32
    """
    B, Cin, H, W = x.shape
    Cin_w, Cout, KH, KW = weight.shape
    k = kernel_size
    assert Cin == Cin_w and KH == k and KW == k
    assert stride == 2 and k % 2 == 0 and padding == k // 2 - 1, (
        "parity-decomposed path covers the 2x-upsampling configs used by "
        "DeconvBlock / GeneratorBlock (stride=2, even k, padding=k/2-1)")

    r = k // 2                      # input rows/cols feeding one output pair
    Hout, Wout = 2 * H, 2 * W
    podd = padding % 2
    # output pair (2t, 2t+1) (p even) or (2t-1, 2t) (p odd) reads input rows
    # [t+o, t+o+r-1]; kernel tap for parity q, window offset dy is
    # kh = q + k - 2 - 2*dy (same formula for both parities of p).
    o_off = (padding // 2 - r + 1) if podd == 0 else ((padding + 1) // 2 - r)
    T_h, T_w = H + podd, W + podd   # number of output pairs per spatial dim

    # ---- JAX glue (NHWC, bf16, single materialization of the patch slab) ----
    x_nhwc = jnp.transpose(x, (0, 2, 3, 1)).astype(compute_dtype)
    pad_lo = max(0, -o_off)
    pad_hi_h = max(0, (T_h - 1) + o_off + (r - 1) - (H - 1))
    pad_hi_w = max(0, (T_w - 1) + o_off + (r - 1) - (W - 1))
    xpad = jnp.pad(x_nhwc, ((0, 0), (pad_lo, pad_hi_h),
                            (pad_lo, pad_hi_w), (0, 0)))
    base = o_off + pad_lo           # >= 0 by construction
    slabs = []
    for dy in range(r):
        for dx in range(r):
            slabs.append(xpad[:, base + dy: base + dy + T_h,
                                base + dx: base + dx + T_w, :])
    # patches[b, t, s, (dy*r + dx)*Cin + ci] = x[b, t+o+dy, s+o+dx, ci]
    patches = jnp.concatenate(slabs, axis=-1)        # (B, T_h, T_w, r*r*Cin)
    K = r * r * Cin
    M = B * T_h * T_w
    patches = patches.reshape(M, K)

    # Wm[(dy*r+dx)*Cin + ci, (q*2+qx)*Cout + co] = W[ci, co, kh(dy,q), kw(dx,qx)]
    ar, aq = np.arange(r), np.arange(2)
    ktap = aq[None, :] + (k - 2) - 2 * ar[:, None]   # (r, 2), values in [0, k-1]
    wsub = weight[:, :, ktap[:, :, None, None], ktap[None, None, :, :]]
    # wsub axes: (ci, co, dy, q, dx, qx) -> rows (dy, dx, ci), cols (q, qx, co)
    wmat = jnp.transpose(wsub, (2, 4, 0, 3, 5, 1)).reshape(K, 4 * Cout)
    wmat = wmat.astype(compute_dtype)
    N = 4 * Cout

    bias_row = jnp.tile(bias.astype(jnp.float32), 4).reshape(1, N)
    alpha_s = jnp.reshape(prelu_alpha, (1,)).astype(jnp.float32)

    # ---- tile sizing: big tiles, >=2 grid steps, fit v7x VMEM budget --------
    tm = max(8, min(_round_up(tm, 8), _round_up(pl.cdiv(M, 2), 8)))
    in_b = jnp.dtype(compute_dtype).itemsize
    out_b = jnp.dtype(out_dtype).itemsize

    def _vmem_bytes(t):
        return (2 * t * K * in_b        # double-buffered patch tile
                + K * N * in_b          # resident weight block
                + 2 * t * N * out_b     # double-buffered output tile
                + 8 * 128 * 4)          # bias tile (padded to a vreg tile)

    VMEM_BUDGET = 40 << 20              # conservative for v7x (64 MiB / TC)
    while _vmem_bytes(tm) > VMEM_BUDGET and tm > 8:
        tm = max(8, _round_up(tm // 2, 8))

    Mp = _round_up(M, tm)
    if Mp != M:
        patches = jnp.pad(patches, ((0, Mp - M), (0, 0)))

    cost = pl.CostEstimate(
        flops=2 * Mp * K * N,
        transcendentals=0,
        bytes_accessed=(Mp * K + K * N) * in_b + N * 4 + Mp * N * out_b)

    out = pl.pallas_call(
        _deconv_block_kernel,
        out_shape=jax.ShapeDtypeStruct((Mp, N), out_dtype),
        grid=(Mp // tm,),
        in_specs=[
            pl.BlockSpec((tm, K), lambda i: (i, 0)),    # patch tile (bf16)
            pl.BlockSpec((K, N), lambda i: (0, 0)),     # full weight (bf16)
            pl.BlockSpec((1, N), lambda i: (0, 0)),     # bias row (f32)
            pl.BlockSpec(memory_space=pltpu.MemorySpace.SMEM),  # PReLU alpha
        ],
        out_specs=pl.BlockSpec((tm, N), lambda i: (i, 0)),
        compiler_params=pltpu.CompilerParams(
            dimension_semantics=("parallel",),
            vmem_limit_bytes=int(min(48 << 20,
                                     max(16 << 20, 2 * _vmem_bytes(tm)))),
        ),
        cost_estimate=cost,
    )(patches, wmat, bias_row, alpha_s)

    # ---- pixel-shuffle assembly + slice off the invalid boundary pair -------
    y = out[:M].astype(jnp.float32).reshape(B, T_h, T_w, 2, 2, Cout)
    y = jnp.transpose(y, (0, 1, 3, 2, 4, 5)).reshape(B, 2 * T_h, 2 * T_w, Cout)
    y = y[:, podd: podd + Hout, podd: podd + Wout, :]
    # TODO(synk): returning NCHW to match the PyTorch interface costs one extra
    # HBM pass; a real model should stay NHWC end-to-end.
    return jnp.transpose(y, (0, 3, 1, 2))


def _reference(x, weight, bias, alpha, k, s, p):
    """Transposed conv via lhs-dilated conv with flipped kernel (f32)."""
    w_conv = jnp.flip(weight, (2, 3)).transpose(1, 0, 2, 3)   # (Cout,Cin,k,k)
    pr = k - 1 - p
    y = lax.conv_general_dilated(
        x, w_conv, window_strides=(1, 1),
        padding=((pr, pr), (pr, pr)),
        lhs_dilation=(s, s),
        dimension_numbers=('NCHW', 'OIHW', 'NCHW'))
    y = y + bias[None, :, None, None]
    return jnp.where(y > 0, y, alpha * y)


if __name__ == "__main__":
    B, Cin, Cout, H, W = 2, 4, 8, 16, 16
    prelu_alpha = jnp.float32(0.25)          # PyTorch PReLU default init

    ok = True
    # (k, s, p): GeneratorBlock's deconv config and the DeconvBlock default.
    for (KSIZE, STRIDE, PAD) in [(6, 2, 2), (4, 2, 1)]:
        key = jax.random.PRNGKey(0)
        kx, kw, kb = jax.random.split(key, 3)
        x = jax.random.normal(kx, (B, Cin, H, W), jnp.float32)
        fan = Cin * KSIZE * KSIZE
        bound = 1.0 / np.sqrt(fan)
        weight = jax.random.uniform(kw, (Cin, Cout, KSIZE, KSIZE),
                                    jnp.float32, -bound, bound)
        bias = jax.random.uniform(kb, (Cout,), jnp.float32, -bound, bound)

        y = deconv_block_forward(x, weight, bias, prelu_alpha,
                                 kernel_size=KSIZE, stride=STRIDE, padding=PAD)
        y = jax.block_until_ready(y)
        assert y.shape == (B, Cout, 2 * H, 2 * W), y.shape

        y_ref = _reference(x, weight, bias, prelu_alpha, KSIZE, STRIDE, PAD)
        y_ref = jax.block_until_ready(y_ref)
        # bf16 operands -> relaxed tolerance (review correctness note).
        np.testing.assert_allclose(np.asarray(y), np.asarray(y_ref),
                                   rtol=2e-2, atol=2e-2)
    if ok:
        print("KERNEL_OK")
</pallas_src>

<mosaic_0001>
module attributes {stable_mosaic.version = 11 : i64} {
  func.func @_deconv_block_kernel(%arg0: i32, %arg1: memref<256x36xbf16, #tpu.memory_space<vmem>>, %arg2: memref<36x32xbf16, #tpu.memory_space<vmem>>, %arg3: memref<1x32xf32, #tpu.memory_space<vmem>>, %arg4: memref<1xf32, #tpu.memory_space<smem>>, %arg5: memref<256x32xf32, #tpu.memory_space<vmem>>) attributes {dimension_semantics = [#tpu.dimension_semantics<parallel>], iteration_bounds = array<i64: 2>, scalar_prefetch = 0 : i64, scratch_operands = 0 : i64, tpu.core_type = #tpu.core_type<tc>, window_params = [{transform_indices = @transform_0, window_bounds = array<i64: 256, 36>}, {pipeline_mode = #tpu.pipeline_mode<synchronous>, transform_indices = @transform_1, window_bounds = array<i64: 36, 32>}, {pipeline_mode = #tpu.pipeline_mode<synchronous>, transform_indices = @transform_2, window_bounds = array<i64: 1, 32>}, {transform_indices = @transform_3, window_bounds = array<i64: 1>}, {transform_indices = @transform_4, window_bounds = array<i64: 256, 32>}]} {
    %c0 = arith.constant 0 : index
    %c0_0 = arith.constant 0 : index
    %0 = vector.load %arg1[%c0, %c0_0] : memref<256x36xbf16, #tpu.memory_space<vmem>>, vector<256x36xbf16>
    %c0_1 = arith.constant 0 : index
    %c0_2 = arith.constant 0 : index
    %1 = vector.load %arg2[%c0_1, %c0_2] : memref<36x32xbf16, #tpu.memory_space<vmem>>, vector<36x32xbf16>
    %cst = arith.constant dense<0.000000e+00> : vector<256x32xf32>
    %2 = tpu.matmul %0, %1, %cst {dimension_numbers = #tpu.dot_dimension_numbers<[1], [0], [0], [1], [0, 0, 1, 1], [], []>} : vector<256x36xbf16>, vector<36x32xbf16>, vector<256x32xf32> -> vector<256x32xf32>
    %c0_3 = arith.constant 0 : index
    %c0_4 = arith.constant 0 : index
    %3 = vector.load %arg3[%c0_3, %c0_4] : memref<1x32xf32, #tpu.memory_space<vmem>>, vector<1x32xf32>
    %4 = vector.broadcast %3 : vector<1x32xf32> to vector<256x32xf32>
    %5 = arith.addf %2, %4 : vector<256x32xf32>
    %c0_5 = arith.constant 0 : index
    %6 = memref.load %arg4[%c0_5] : memref<1xf32, #tpu.memory_space<smem>>
    %cst_6 = arith.constant 0.000000e+00 : f32
    %7 = vector.broadcast %cst_6 : f32 to vector<256x32xf32>
    %8 = arith.cmpf ogt, %5, %7 : vector<256x32xf32>
    %9 = vector.broadcast %6 : f32 to vector<256x32xf32>
    %10 = arith.mulf %9, %5 : vector<256x32xf32>
    %11 = arith.select %8, %5, %10 : vector<256x32xi1>, vector<256x32xf32>
    %c0_7 = arith.constant 0 : index
    %c0_8 = arith.constant 0 : index
    %12 = vector.load %arg5[%c0_7, %c0_8] : memref<256x32xf32, #tpu.memory_space<vmem>>, vector<256x32xf32>
    tpu.vector_store %arg5[%c0_7, %c0_8], %11 {strides = array<i32>} : memref<256x32xf32, #tpu.memory_space<vmem>>, vector<256x32xf32>,
    return
  }
  func.func @transform_0(%arg0: i32) -> (i32, i32) {
    %c0_i32 = arith.constant 0 : i32
    %c0_i32_0 = arith.constant 0 : i32
    return %arg0, %c0_i32 : i32, i32
  }
  func.func @transform_1(%arg0: i32) -> (i32, i32) {
    %c0_i32 = arith.constant 0 : i32
    %c0_i32_0 = arith.constant 0 : i32
    %c0_i32_1 = arith.constant 0 : i32
    return %c0_i32, %c0_i32_0 : i32, i32
  }
  func.func @transform_2(%arg0: i32) -> (i32, i32) {
    %c0_i32 = arith.constant 0 : i32
    %c0_i32_0 = arith.constant 0 : i32
    %c0_i32_1 = arith.constant 0 : i32
    return %c0_i32, %c0_i32_0 : i32, i32
  }
  func.func @transform_3(%arg0: i32) -> i32 {
    %c0_i32 = arith.constant 0 : i32
    %c0_i32_0 = arith.constant 0 : i32
    return %c0_i32 : i32
  }
  func.func @transform_4(%arg0: i32) -> (i32, i32) {
    %c0_i32 = arith.constant 0 : i32
    %c0_i32_0 = arith.constant 0 : i32
    return %arg0, %c0_i32 : i32, i32
  }
}

</mosaic_0001>

<llo_original>
// kernel: tpu_custom_call.1
$region0: #{tpu_custom_call.1}
  #allocation0 [shape = 'u32[]', space=smem, size = 0x4, offset = 0x4, fixed_abs, tag = 'smem constant byte address 0x4 - core index']
  #allocation1 [shape = 'u32[144,128]{1,0:T(1,128)}', space=vmem, size = 0x12000, scoped, tag = 'internal scratch']
  #allocation2 [shape = 'f32[1]{0:T(128)S(6)}', space=smem, size = 0x200, scoped, tag = 'scoped memory for tpu_custom_call.1']
  %s0 = inlined_call_operand.vmem [shape: bf16[512,36], index: 0, kind: input, shape index: {}]
  %s1 = inlined_call_operand.vmem [shape: bf16[36,32], index: 1, kind: input, shape index: {}]
  %s2 = inlined_call_operand.vmem [shape: f32[1,32], index: 2, kind: input, shape index: {}]
  %s3 = inlined_call_operand.<no memory space> [shape: f32[1], index: 3, kind: input, shape index: {}]
  %s4 = inlined_call_operand.vmem [shape: f32[512,32], index: 4, kind: output, shape index: {}]
  %s5 = sld [smem:[#allocation0]]
  $region49: #{tpu_custom_call.1} parent=0
    _
  %s7 = ssub.s32 1, %s5
  %s8 = scalar_select 0, %s7, %s5
  %9 = sst [smem:[#allocation2]] %s3
  loop: start=0, step=1, limit=4
  $region2: #{tpu_custom_call.1} parent=0 // loop_pre_header
    _
  $region3: #{tpu_custom_call.1} parent=0 // loop_header
    %s11 = sphi 0, %s15
    %p12 = scmp.ge.s32.totalorder %s11, 4
    %s21 = sphi 0, %s23
    %s24 = sphi 0, %s21
    %s25 = sphi 0, %s24
    %s41 = sphi 0, %s25
    %s45 = sphi 0, %s45
    %s47 = sphi 0, %s45
    %s48 = sphi 0, %s47
    %s62 = sphi 0, %s48
    %s66 = sphi 0, %s66
    %s68 = sphi 0, %s66
    %s69 = sphi 0, %s68
    %s83 = sphi 0, %s69
    %s87 = sphi 0, %s87
    %s89 = sphi 0, %s87
    %s90 = sphi 0, %s89
    %s104 = sphi 0, %s90
    %s110 = sphi 0, %s112
    %s113 = sphi 0, %s110
    %s114 = sphi 0, %s113
    %s130 = sphi 0, %s114
  $region4: #{tpu_custom_call.1} parent=0 // loop_header_branch
    %14 = sbr.rel (%p12) target = $region8
  $region5: #{tpu_custom_call.1} parent=0 // loop_body
    %s16 = ssub.s32 %s11, 1
    %s17 = ssub.s32 %s11, 2
    %s18 = sadd.s32 %s11, 1
    %s19 = ssub.s32 %s11, %s18
    %p20 = scmp.eq.s32.totalorder %s19, 0
    %s22 = sadd.s32 %s21, 1
    %s23 = scalar_select %p20, %s21, %s22
    %p26 = pneg %p20
    %p27 = scmp.eq.s32.totalorder %s11, 1
    %p28 = por %p26, %p27
    %p29 = scmp.ne.s32.totalorder %s21, %s24
    %p30 = scmp.eq.s32.totalorder %s11, 0
    %p31 = por %p29, %p30
    %p32 = scmp.ne.s32.totalorder %s21, %s24
    %p33 = scmp.eq.s32.totalorder %s16, 1
    %p34 = por %p32, %p33
    %p35 = scmp.ne.s32.totalorder %s24, %s25
    %p36 = scmp.eq.s32.totalorder %s16, 0
    %p37 = por %p35, %p36
    %p38 = scmp.ne.s32.totalorder %s24, %s25
    %p39 = scmp.eq.s32.totalorder %s17, 1
    %p40 = por %p38, %p39
    %p42 = scmp.ne.s32.totalorder %s25, %s41
    %p43 = scmp.eq.s32.totalorder %s17, 0
    %p44 = por %p42, %p43
    %s46 = sadd.s32 %s45, 1
    %p49 = scmp.eq.s32.totalorder %s11, 1
    %p50 = scmp.ne.s32.totalorder %s45, %s47
    %p51 = scmp.eq.s32.totalorder %s11, 0
    %p52 = por %p50, %p51
    %p53 = scmp.ne.s32.totalorder %s45, %s47
    %p54 = scmp.eq.s32.totalorder %s16, 1
    %p55 = por %p53, %p54
    %p56 = scmp.ne.s32.totalorder %s47, %s48
    %p57 = scmp.eq.s32.totalorder %s16, 0
    %p58 = por %p56, %p57
    %p59 = scmp.ne.s32.totalorder %s47, %s48
    %p60 = scmp.eq.s32.totalorder %s17, 1
    %p61 = por %p59, %p60
    %p63 = scmp.ne.s32.totalorder %s48, %s62
    %p64 = scmp.eq.s32.totalorder %s17, 0
    %p65 = por %p63, %p64
    %s67 = sadd.s32 %s66, 1
    %p70 = scmp.eq.s32.totalorder %s11, 1
    %p71 = scmp.ne.s32.totalorder %s66, %s68
    %p72 = scmp.eq.s32.totalorder %s11, 0
    %p73 = por %p71, %p72
    %p74 = scmp.ne.s32.totalorder %s66, %s68
    %p75 = scmp.eq.s32.totalorder %s16, 1
    %p76 = por %p74, %p75
    %p77 = scmp.ne.s32.totalorder %s68, %s69
    %p78 = scmp.eq.s32.totalorder %s16, 0
    %p79 = por %p77, %p78
    %p80 = scmp.ne.s32.totalorder %s68, %s69
    %p81 = scmp.eq.s32.totalorder %s17, 1
    %p82 = por %p80, %p81
    %p84 = scmp.ne.s32.totalorder %s69, %s83
    %p85 = scmp.eq.s32.totalorder %s17, 0
    %p86 = por %p84, %p85
    %s88 = sadd.s32 %s87, 1
    %p91 = scmp.eq.s32.totalorder %s11, 1
    %p92 = scmp.ne.s32.totalorder %s87, %s89
    %p93 = scmp.eq.s32.totalorder %s11, 0
    %p94 = por %p92, %p93
    %p95 = scmp.ne.s32.totalorder %s87, %s89
    %p96 = scmp.eq.s32.totalorder %s16, 1
    %p97 = por %p95, %p96
    %p98 = scmp.ne.s32.totalorder %s89, %s90
    %p99 = scmp.eq.s32.totalorder %s16, 0
    %p100 = por %p98, %p99
    %p101 = scmp.ne.s32.totalorder %s89, %s90
    %p102 = scmp.eq.s32.totalorder %s17, 1
    %p103 = por %p101, %p102
    %p105 = scmp.ne.s32.totalorder %s90, %s104
    %p106 = scmp.eq.s32.totalorder %s17, 0
    %p107 = por %p105, %p106
    %s108 = ssub.s32 %s11, %s18
    %p109 = scmp.eq.s32.totalorder %s108, 0
    %s111 = sadd.s32 %s110, 1
    %s112 = scalar_select %p109, %s110, %s111
    %p115 = pneg %p109
    %p116 = scmp.eq.s32.totalorder %s11, 1
    %p117 = por %p115, %p116
    %p118 = scmp.ne.s32.totalorder %s110, %s113
    %p119 = scmp.eq.s32.totalorder %s11, 0
    %p120 = por %p118, %p119
    %p121 = scmp.ne.s32.totalorder %s110, %s113
    %p122 = scmp.eq.s32.totalorder %s16, 1
    %p123 = por %p121, %p122
    %p124 = scmp.ne.s32.totalorder %s113, %s114
    %p125 = scmp.eq.s32.totalorder %s16, 0
    %p126 = por %p124, %p125
    %p127 = scmp.ne.s32.totalorder %s113, %s114
    %p128 = scmp.eq.s32.totalorder %s17, 1
    %p129 = por %p127, %p128
    %p131 = scmp.ne.s32.totalorder %s114, %s130
    %p132 = scmp.eq.s32.totalorder %s17, 0
    %p133 = por %p131, %p132
    %p134 = scmp.le.s32.totalorder 1, %s11
    %p135 = scmp.lt.s32.totalorder %s11, 3
    %p136 = pnand %p134, %p135
    %p137 = pneg %p136
    // Predicated region
    $region9: #{tpu_custom_call.1} parent=5 // pred_check
      _
    $region10: #{tpu_custom_call.1} parent=5 // pred_check_branch
      %139 = sbr.rel (%p136) target = $region12
    $region11: #{tpu_custom_call.1} parent=5 // pred_region
      %s140 = ssub.s32 %s11, 1
      // Predicated region
      $region13: #{tpu_custom_call.1} parent=11 // pred_check
        %p141 = pneg %p58
      $region14: #{tpu_custom_call.1} parent=11 // pred_check_branch
        %143 = sbr.rel (%p141) target = $region16
      $region15: #{tpu_custom_call.1} parent=11 // pred_region
        _
      $region16: #{tpu_custom_call.1} parent=11 // pred_fallthru
        _
      // Predicated region
      $region17: #{tpu_custom_call.1} parent=11 // pred_check
        %p144 = pneg %p79
      $region18: #{tpu_custom_call.1} parent=11 // pred_check_branch
        %146 = sbr.rel (%p144) target = $region20
      $region19: #{tpu_custom_call.1} parent=11 // pred_region
        _
      $region20: #{tpu_custom_call.1} parent=11 // pred_fallthru
        _
      // Predicated region
      $region21: #{tpu_custom_call.1} parent=11 // pred_check
        %p147 = pneg %p100
      $region22: #{tpu_custom_call.1} parent=11 // pred_check_branch
        %149 = sbr.rel (%p147) target = $region24
      $region23: #{tpu_custom_call.1} parent=11 // pred_region
        _
      $region24: #{tpu_custom_call.1} parent=11 // pred_fallthru
        _
    $region12: #{tpu_custom_call.1} parent=5 // pred_fallthru
      _
    %p150 = scmp.lt.s32.totalorder %s11, 2
    // Predicated region
    $region25: #{tpu_custom_call.1} parent=5 // pred_check
      %p151 = pneg %p150
    $region26: #{tpu_custom_call.1} parent=5 // pred_check_branch
      %153 = sbr.rel (%p151) target = $region28
    $region27: #{tpu_custom_call.1} parent=5 // pred_region
      // Predicated region
      $region29: #{tpu_custom_call.1} parent=27 // pred_check
        %p154 = pneg %p31
      $region30: #{tpu_custom_call.1} parent=27 // pred_check_branch
        %156 = sbr.rel (%p154) target = $region32
      $region31: #{tpu_custom_call.1} parent=27 // pred_region
        %s157 = smul.u32 32, %s11
        %p158 = scmp.lt.s32.totalorder %s157, 63
        %s159 = scalar_select %p158, %s157, 63
        %s160 = smul.addr %s159, 4
        %s161 = scalar_lea.vmem %s0, %s160
        %s162 = smul.u32 32, %s11
      $region32: #{tpu_custom_call.1} parent=27 // pred_fallthru
        _
    $region28: #{tpu_custom_call.1} parent=5 // pred_fallthru
      _
    %p163 = scmp.le.s32.totalorder 1, %s11
    %p164 = scmp.lt.s32.totalorder %s11, 3
    %p165 = pnand %p163, %p164
    %p166 = pneg %p165
    // Predicated region
    $region33: #{tpu_custom_call.1} parent=5 // pred_check
      _
    $region34: #{tpu_custom_call.1} parent=5 // pred_check_branch
      %168 = sbr.rel (%p165) target = $region36
    $region35: #{tpu_custom_call.1} parent=5 // pred_region
      %s169 = ssub.s32 %s11, 1
      %s170 = smul.u32 32, %s16
      %p171 = scmp.lt.s32.totalorder %s170, 63
      %s172 = scalar_select %p171, %s170, 63
      %s173 = smul.addr %s172, 4
      %s174 = scalar_lea.vmem %s0, %s173
      %p175 = pneg %p37
      %p176 = pneg %p34
      %p177 = pneg %p58
      %p178 = pneg %p55
      %p179 = pneg %p79
      %p180 = pneg %p76
      %p181 = pneg %p100
      %p182 = pneg %p97
      %p183 = pneg %p126
      %p184 = pneg %p123
      %s185 = smul.u32 32, %s16
      %p186 = scmp.lt.s32.totalorder %s185, 63
      %s187 = scalar_select %p186, %s185, 63
      %s188 = smul.addr %s187, 8
      %s189 = scalar_lea.vmem %s4, %s188
      %s190 = smul.u32 32, %s16
      %p191 = scmp.lt.s32.totalorder %s190, 63
      %s192 = scalar_select %p191, %s190, 63
      %s193 = smul.addr %s192, 4
      %s194 = scalar_lea.vmem %s0, %s193
      %s195 = smul.u32 32, %s16
      %s196 = smul.u32 32, %s16
      %p197 = scmp.lt.s32.totalorder %s196, 63
      %s198 = scalar_select %p197, %s196, 63
      %s199 = smul.addr %s198, 8
      %s200 = scalar_lea.vmem %s4, %s199
      %s201 = smul.u32 32, %s16
      %v203 = vld [vmem:[%s194] sm:$0xf]
      %v204 = vld [vmem:[%s194 + $0x4] sm:$0xf]
      %v205 = vld [vmem:[%s194 + $0x8] sm:$0xf]
      %v206 = vld [vmem:[%s194 + $0xc] sm:$0xf]
      %v207 = vld [vmem:[%s194 + $0x10] sm:$0xf]
      %v208 = vld [vmem:[%s194 + $0x14] sm:$0xf]
      %v209 = vld [vmem:[%s194 + $0x18] sm:$0xf]
      %v210 = vld [vmem:[%s194 + $0x1c] sm:$0xf]
      %v211 = vld [vmem:[%s194 + $0x20] sm:$0xf]
      %v212 = vld [vmem:[%s194 + $0x24] sm:$0xf]
      %v213 = vld [vmem:[%s194 + $0x28] sm:$0xf]
      %v214 = vld [vmem:[%s194 + $0x2c] sm:$0xf]
      %v215 = vld [vmem:[%s194 + $0x30] sm:$0xf]
      %v216 = vld [vmem:[%s194 + $0x34] sm:$0xf]
      %v217 = vld [vmem:[%s194 + $0x38] sm:$0xf]
      %v218 = vld [vmem:[%s194 + $0x3c] sm:$0xf]
      %v219 = vld [vmem:[%s194 + $0x40] sm:$0xf]
      %v220 = vld [vmem:[%s194 + $0x44] sm:$0xf]
      %v221 = vld [vmem:[%s194 + $0x48] sm:$0xf]
      %v222 = vld [vmem:[%s194 + $0x4c] sm:$0xf]
      %v223 = vld [vmem:[%s194 + $0x50] sm:$0xf]
      %v224 = vld [vmem:[%s194 + $0x54] sm:$0xf]
      %v225 = vld [vmem:[%s194 + $0x58] sm:$0xf]
      %v226 = vld [vmem:[%s194 + $0x5c] sm:$0xf]
      %v227 = vld [vmem:[%s194 + $0x60] sm:$0xf]
      %v228 = vld [vmem:[%s194 + $0x64] sm:$0xf]
      %v229 = vld [vmem:[%s194 + $0x68] sm:$0xf]
      %v230 = vld [vmem:[%s194 + $0x6c] sm:$0xf]
      %v231 = vld [vmem:[%s194 + $0x70] sm:$0xf]
      %v232 = vld [vmem:[%s194 + $0x74] sm:$0xf]
      %v233 = vld [vmem:[%s194 + $0x78] sm:$0xf]
      %v234 = vld [vmem:[%s194 + $0x7c] sm:$0xf]
      %v235 = vld [vmem:[%s1] sm:$0xf]
      %v236 = vld [vmem:[%s1 + $0x4] sm:$0xf]
      %v237 = vld [vmem:[%s1 + $0x8] sm:$0xf]
      %v238 = vld [vmem:[%s1 + $0xc] sm:$0xf]
      %v239 = vld [vmem:[%s1 + $0x10] sm:$0x3]
      %v240 = vld [vmem:[%s2] sm:$0x1]
      %v242 = vlaneseq
      %v243 = vshrl.u32 %v242, 7
      %v244 = vsub.s32 0, %v243
      %v245 = vrot.slane %v240, %v244
      %v279 = vunpack.c.l.b16 %v203
      %v280 = vunpack.c.l.b16 %v204
      %v281 = vunpack.c.l.b16 %v205
      %v282 = vunpack.c.l.b16 %v206
      %v283 = vunpack.c.l.b16 %v207
      %v284 = vunpack.c.l.b16 %v208
      %v285 = vunpack.c.l.b16 %v209
      %v286 = vunpack.c.l.b16 %v210
      %v287 = vunpack.c.l.b16 %v211
      %v288 = vunpack.c.l.b16 %v212
      %v289 = vunpack.c.l.b16 %v213
      %v290 = vunpack.c.l.b16 %v214
      %v291 = vunpack.c.l.b16 %v215
      %v292 = vunpack.c.l.b16 %v216
      %v293 = vunpack.c.l.b16 %v217
      %v294 = vunpack.c.l.b16 %v218
      %v295 = vunpack.c.l.b16 %v219
      %v296 = vunpack.c.l.b16 %v220
      %v297 = vunpack.c.l.b16 %v221
      %v298 = vunpack.c.l.b16 %v222
      %v299 = vunpack.c.l.b16 %v223
      %v300 = vunpack.c.l.b16 %v224
      %v301 = vunpack.c.l.b16 %v225
      %v302 = vunpack.c.l.b16 %v226
      %v303 = vunpack.c.l.b16 %v227
      %v304 = vunpack.c.l.b16 %v228
      %v305 = vunpack.c.l.b16 %v229
      %v306 = vunpack.c.l.b16 %v230
      %v307 = vunpack.c.l.b16 %v231
      %v308 = vunpack.c.l.b16 %v232
      %v309 = vunpack.c.l.b16 %v233
      %v310 = vunpack.c.l.b16 %v234
      %v311 = vpack.c.b16 %v280, %v279
      %v312 = vpack.c.b16 %v282, %v281
      %v313 = vpack.c.b16 %v284, %v283
      %v314 = vpack.c.b16 %v286, %v285
      %v315 = vpack.c.b16 %v288, %v287
      %v316 = vpack.c.b16 %v290, %v289
      %v317 = vpack.c.b16 %v292, %v291
      %v318 = vpack.c.b16 %v294, %v293
      %v319 = vpack.c.b16 %v296, %v295
      %v320 = vpack.c.b16 %v298, %v297
      %v321 = vpack.c.b16 %v300, %v299
      %v322 = vpack.c.b16 %v302, %v301
      %v323 = vpack.c.b16 %v304, %v303
      %v324 = vpack.c.b16 %v306, %v305
      %v325 = vpack.c.b16 %v308, %v307
      %v326 = vpack.c.b16 %v310, %v309
      %v332 = vunpack.c.l.b16 %v235
      %v333 = vunpack.c.l.b16 %v236
      %v334 = vunpack.c.l.b16 %v237
      %v335 = vunpack.c.l.b16 %v238
      %v336 = vunpack.c.l.b16 %v239
      %v337 = vpack.c.b16 %v333, %v332
      %v338 = vpack.c.b16 %v335, %v334
      %v339 = vpack.c.b16 %v336, %v336
      %vm342 = vcmask 293888
      %v344 = vsel %vm342, %v311, 0
      %v347 = vsel %vm342, %v312, 0
      %v350 = vsel %vm342, %v313, 0
      %v353 = vsel %vm342, %v314, 0
      %v356 = vsel %vm342, %v315, 0
      %v359 = vsel %vm342, %v316, 0
      %v362 = vsel %vm342, %v317, 0
      %v365 = vsel %vm342, %v318, 0
      %v368 = vsel %vm342, %v319, 0
      %v371 = vsel %vm342, %v320, 0
      %v374 = vsel %vm342, %v321, 0
      %v377 = vsel %vm342, %v322, 0
      %v380 = vsel %vm342, %v323, 0
      %v383 = vsel %vm342, %v324, 0
      %v386 = vsel %vm342, %v325, 0
      %v389 = vsel %vm342, %v326, 0
      %vm391 = vcmask 1041408
      %v393 = vsel %vm391, %v339, 0
      %395 = vmatprep.subr.bf16.mxu0 0
      %396 = vmatpush1.bf16.msra.mxu0 %v337
      %397 = vmatprep.subr.bf16.mxu0 0
      %398 = vmatpush1.bf16.msra.mxu0 %v338
      %399 = vmatprep.subr.bf16.mxu0 0
      %400 = vmatpush1.bf16.msra.mxu0 %v393
      %401 = vmatprep.subr.bf16.mxu0 0
      %402 = vmatpush1.bf16.msra.mxu0 0
      %403 = vmatprep.subr.bf16.mxu0 0
      %404 = vmatpush1.bf16.msra.mxu0 0
      %405 = vmatprep.subr.bf16.mxu0 0
      %406 = vmatpush1.bf16.msra.mxu0 0
      %407 = vmatprep.subr.bf16.mxu0 0
      %408 = vmatpush1.bf16.msra.mxu0 0
      %409 = vmatprep.subr.bf16.mxu0 0
      %410 = vmatpush1.bf16.msra.mxu0 0
      %411 = vmatprep.subr.bf16.mxu0 0
      %412 = vmatpush1.bf16.msra.mxu0 0
      %413 = vmatprep.subr.bf16.mxu0 0
      %414 = vmatpush1.bf16.msra.mxu0 0
      %415 = vmatprep.subr.bf16.mxu0 0
      %416 = vmatpush1.bf16.msra.mxu0 0
      %417 = vmatprep.subr.bf16.mxu0 0
      %418 = vmatpush1.bf16.msra.mxu0 0
      %419 = vmatprep.subr.bf16.mxu0 0
      %420 = vmatpush1.bf16.msra.mxu0 0
      %421 = vmatprep.subr.bf16.mxu0 0
      %422 = vmatpush1.bf16.msra.mxu0 0
      %423 = vmatprep.subr.bf16.mxu0 0
      %424 = vmatpush1.bf16.msra.mxu0 0
      %425 = vmatprep.subr.bf16.mxu0 0
      %426 = vmatpush1.bf16.msra.mxu0 0
      %427 = vmatprep.mubr.bf16.mxu0 0
      %428 = vmatmul.mubr.bf16.gmra.mrb[0].mxu0 %v344
      %v429 = vpop.f32.mrb[0].mxu0
      %v430 = vadd.f32 %v245, %v429
      %v431 = vpop.f32.mrb[0].mxu0
      %v432 = vpop.f32.mrb[0].mxu0
      %v433 = vadd.f32 %v245, %v432
      %v434 = vpop.f32.mrb[0].mxu0
      %435 = vmatprep.mubr.bf16.mxu0 0
      %436 = vmatmul.mubr.bf16.gmra.mrb[0].mxu0 %v347
      %v437 = vpop.f32.mrb[0].mxu0
      %v438 = vadd.f32 %v245, %v437
      %v439 = vpop.f32.mrb[0].mxu0
      %v440 = vpop.f32.mrb[0].mxu0
      %v441 = vadd.f32 %v245, %v440
      %v442 = vpop.f32.mrb[0].mxu0
      %443 = vmatprep.mubr.bf16.mxu0 0
      %444 = vmatmul.mubr.bf16.gmra.mrb[0].mxu0 %v350
      %v445 = vpop.f32.mrb[0].mxu0
      %v446 = vadd.f32 %v245, %v445
      %v447 = vpop.f32.mrb[0].mxu0
      %v448 = vpop.f32.mrb[0].mxu0
      %v449 = vadd.f32 %v245, %v448
      %v450 = vpop.f32.mrb[0].mxu0
      %451 = vmatprep.mubr.bf16.mxu0 0
      %452 = vmatmul.mubr.bf16.gmra.mrb[0].mxu0 %v353
      %v453 = vpop.f32.mrb[0].mxu0
      %v454 = vadd.f32 %v245, %v453
      %v455 = vpop.f32.mrb[0].mxu0
      %v456 = vpop.f32.mrb[0].mxu0
      %v457 = vadd.f32 %v245, %v456
      %v458 = vpop.f32.mrb[0].mxu0
      %459 = vmatprep.mubr.bf16.mxu0 0
      %460 = vmatmul.mubr.bf16.gmra.mrb[0].mxu0 %v356
      %v461 = vpop.f32.mrb[0].mxu0
      %v462 = vadd.f32 %v245, %v461
      %v463 = vpop.f32.mrb[0].mxu0
      %v464 = vpop.f32.mrb[0].mxu0
      %v465 = vadd.f32 %v245, %v464
      %v466 = vpop.f32.mrb[0].mxu0
      %467 = vmatprep.mubr.bf16.mxu0 0
      %468 = vmatmul.mubr.bf16.gmra.mrb[0].mxu0 %v359
      %v469 = vpop.f32.mrb[0].mxu0
      %v470 = vadd.f32 %v245, %v469
      %v471 = vpop.f32.mrb[0].mxu0
      %v472 = vpop.f32.mrb[0].mxu0
      %v473 = vadd.f32 %v245, %v472
      %v474 = vpop.f32.mrb[0].mxu0
      %475 = vmatprep.mubr.bf16.mxu0 0
      %476 = vmatmul.mubr.bf16.gmra.mrb[0].mxu0 %v362
      %v477 = vpop.f32.mrb[0].mxu0
      %v478 = vadd.f32 %v245, %v477
      %v479 = vpop.f32.mrb[0].mxu0
      %v480 = vpop.f32.mrb[0].mxu0
      %v481 = vadd.f32 %v245, %v480
      %v482 = vpop.f32.mrb[0].mxu0
      %483 = vmatprep.mubr.bf16.mxu0 0
      %484 = vmatmul.mubr.bf16.gmra.mrb[0].mxu0 %v365
      %v485 = vpop.f32.mrb[0].mxu0
      %v486 = vadd.f32 %v245, %v485
      %v487 = vpop.f32.mrb[0].mxu0
      %v488 = vpop.f32.mrb[0].mxu0
      %v489 = vadd.f32 %v245, %v488
      %v490 = vpop.f32.mrb[0].mxu0
      %491 = vmatprep.mubr.bf16.mxu0 0
      %492 = vmatmul.mubr.bf16.gmra.mrb[0].mxu0 %v368
      %v493 = vpop.f32.mrb[0].mxu0
      %v494 = vadd.f32 %v245, %v493
      %v495 = vpop.f32.mrb[0].mxu0
      %v496 = vpop.f32.mrb[0].mxu0
      %v497 = vadd.f32 %v245, %v496
      %v498 = vpop.f32.mrb[0].mxu0
      %499 = vmatprep.mubr.bf16.mxu0 0
      %500 = vmatmul.mubr.bf16.gmra.mrb[0].mxu0 %v371
      %v501 = vpop.f32.mrb[0].mxu0
      %v502 = vadd.f32 %v245, %v501
      %v503 = vpop.f32.mrb[0].mxu0
      %v504 = vpop.f32.mrb[0].mxu0
      %v505 = vadd.f32 %v245, %v504
      %v506 = vpop.f32.mrb[0].mxu0
      %507 = vmatprep.mubr.bf16.mxu0 0
      %508 = vmatmul.mubr.bf16.gmra.mrb[0].mxu0 %v374
      %v509 = vpop.f32.mrb[0].mxu0
      %v510 = vadd.f32 %v245, %v509
      %v511 = vpop.f32.mrb[0].mxu0
      %v512 = vpop.f32.mrb[0].mxu0
      %v513 = vadd.f32 %v245, %v512
      %v514 = vpop.f32.mrb[0].mxu0
      %515 = vmatprep.mubr.bf16.mxu0 0
      %516 = vmatmul.mubr.bf16.gmra.mrb[0].mxu0 %v377
      %v517 = vpop.f32.mrb[0].mxu0
      %v518 = vadd.f32 %v245, %v517
      %v519 = vpop.f32.mrb[0].mxu0
      %v520 = vpop.f32.mrb[0].mxu0
      %v521 = vadd.f32 %v245, %v520
      %v522 = vpop.f32.mrb[0].mxu0
      %523 = vmatprep.mubr.bf16.mxu0 0
      %524 = vmatmul.mubr.bf16.gmra.mrb[0].mxu0 %v380
      %v525 = vpop.f32.mrb[0].mxu0
      %v526 = vadd.f32 %v245, %v525
      %v527 = vpop.f32.mrb[0].mxu0
      %v528 = vpop.f32.mrb[0].mxu0
      %v529 = vadd.f32 %v245, %v528
      %v530 = vpop.f32.mrb[0].mxu0
      %531 = vmatprep.mubr.bf16.mxu0 0
      %532 = vmatmul.mubr.bf16.gmra.mrb[0].mxu0 %v383
      %v533 = vpop.f32.mrb[0].mxu0
      %v534 = vadd.f32 %v245, %v533
      %v535 = vpop.f32.mrb[0].mxu0
      %v536 = vpop.f32.mrb[0].mxu0
      %v537 = vadd.f32 %v245, %v536
      %v538 = vpop.f32.mrb[0].mxu0
      %539 = vmatprep.mubr.bf16.mxu0 0
      %540 = vmatmul.mubr.bf16.gmra.mrb[0].mxu0 %v386
      %v541 = vpop.f32.mrb[0].mxu0
      %v542 = vadd.f32 %v245, %v541
      %v543 = vpop.f32.mrb[0].mxu0
      %v544 = vpop.f32.mrb[0].mxu0
      %v545 = vadd.f32 %v245, %v544
      %v546 = vpop.f32.mrb[0].mxu0
      %547 = vmatprep.mubr.bf16.mxu0 0
      %548 = vmatmul.mubr.bf16.gmra.mrb[0].mxu0 %v389
      %v549 = vpop.f32.mrb[0].mxu0
      %v550 = vadd.f32 %v245, %v549
      %v551 = vpop.f32.mrb[0].mxu0
      %v552 = vpop.f32.mrb[0].mxu0
      %v553 = vadd.f32 %v245, %v552
      %v554 = vpop.f32.mrb[0].mxu0
      %555 = vdwg.mxu0
      %s556 = sld [smem:[#allocation2]]
      %vm557 = vcmp.gt.f32.partialorder %v430, 0.0
      %vm558 = vcmp.gt.f32.partialorder %v433, 0.0
      %vm559 = vcmp.gt.f32.partialorder %v438, 0.0
      %vm560 = vcmp.gt.f32.partialorder %v441, 0.0
      %vm561 = vcmp.gt.f32.partialorder %v446, 0.0
      %vm562 = vcmp.gt.f32.partialorder %v449, 0.0
      %vm563 = vcmp.gt.f32.partialorder %v454, 0.0
      %vm564 = vcmp.gt.f32.partialorder %v457, 0.0
      %vm565 = vcmp.gt.f32.partialorder %v462, 0.0
      %vm566 = vcmp.gt.f32.partialorder %v465, 0.0
      %vm567 = vcmp.gt.f32.partialorder %v470, 0.0
      %vm568 = vcmp.gt.f32.partialorder %v473, 0.0
      %vm569 = vcmp.gt.f32.partialorder %v478, 0.0
      %vm570 = vcmp.gt.f32.partialorder %v481, 0.0
      %vm571 = vcmp.gt.f32.partialorder %v486, 0.0
      %vm572 = vcmp.gt.f32.partialorder %v489, 0.0
      %vm573 = vcmp.gt.f32.partialorder %v494, 0.0
      %vm574 = vcmp.gt.f32.partialorder %v497, 0.0
      %vm575 = vcmp.gt.f32.partialorder %v502, 0.0
      %vm576 = vcmp.gt.f32.partialorder %v505, 0.0
      %vm577 = vcmp.gt.f32.partialorder %v510, 0.0
      %vm578 = vcmp.gt.f32.partialorder %v513, 0.0
      %vm579 = vcmp.gt.f32.partialorder %v518, 0.0
      %vm580 = vcmp.gt.f32.partialorder %v521, 0.0
      %vm581 = vcmp.gt.f32.partialorder %v526, 0.0
      %vm582 = vcmp.gt.f32.partialorder %v529, 0.0
      %vm583 = vcmp.gt.f32.partialorder %v534, 0.0
      %vm584 = vcmp.gt.f32.partialorder %v537, 0.0
      %vm585 = vcmp.gt.f32.partialorder %v542, 0.0
      %vm586 = vcmp.gt.f32.partialorder %v545, 0.0
      %vm587 = vcmp.gt.f32.partialorder %v550, 0.0
      %vm588 = vcmp.gt.f32.partialorder %v553, 0.0
      %v589 = vstv %s556
      %v590 = vmul.f32 %v589, %v430
      %v591 = vmul.f32 %v589, %v433
      %v592 = vmul.f32 %v589, %v438
      %v593 = vmul.f32 %v589, %v441
      %v594 = vmul.f32 %v589, %v446
      %v595 = vmul.f32 %v589, %v449
      %v596 = vmul.f32 %v589, %v454
      %v597 = vmul.f32 %v589, %v457
      %v598 = vmul.f32 %v589, %v462
      %v599 = vmul.f32 %v589, %v465
      %v600 = vmul.f32 %v589, %v470
      %v601 = vmul.f32 %v589, %v473
      %v602 = vmul.f32 %v589, %v478
      %v603 = vmul.f32 %v589, %v481
      %v604 = vmul.f32 %v589, %v486
      %v605 = vmul.f32 %v589, %v489
      %v606 = vmul.f32 %v589, %v494
      %v607 = vmul.f32 %v589, %v497
      %v608 = vmul.f32 %v589, %v502
      %v609 = vmul.f32 %v589, %v505
      %v610 = vmul.f32 %v589, %v510
      %v611 = vmul.f32 %v589, %v513
      %v612 = vmul.f32 %v589, %v518
      %v613 = vmul.f32 %v589, %v521
      %v614 = vmul.f32 %v589, %v526
      %v615 = vmul.f32 %v589, %v529
      %v616 = vmul.f32 %v589, %v534
      %v617 = vmul.f32 %v589, %v537
      %v618 = vmul.f32 %v589, %v542
      %v619 = vmul.f32 %v589, %v545
      %v620 = vmul.f32 %v589, %v550
      %v621 = vmul.f32 %v589, %v553
      %v622 = vsel %vm557, %v430, %v590
      %v623 = vsel %vm558, %v433, %v591
      %v624 = vsel %vm559, %v438, %v592
      %v625 = vsel %vm560, %v441, %v593
      %v626 = vsel %vm561, %v446, %v594
      %v627 = vsel %vm562, %v449, %v595
      %v628 = vsel %vm563, %v454, %v596
      %v629 = vsel %vm564, %v457, %v597
      %v630 = vsel %vm565, %v462, %v598
      %v631 = vsel %vm566, %v465, %v599
      %v632 = vsel %vm567, %v470, %v600
      %v633 = vsel %vm568, %v473, %v601
      %v634 = vsel %vm569, %v478, %v602
      %v635 = vsel %vm570, %v481, %v603
      %v636 = vsel %vm571, %v486, %v604
      %v637 = vsel %vm572, %v489, %v605
      %v638 = vsel %vm573, %v494, %v606
      %v639 = vsel %vm574, %v497, %v607
      %v640 = vsel %vm575, %v502, %v608
      %v641 = vsel %vm576, %v505, %v609
      %v642 = vsel %vm577, %v510, %v610
      %v643 = vsel %vm578, %v513, %v611
      %v644 = vsel %vm579, %v518, %v612
      %v645 = vsel %vm580, %v521, %v613
      %v646 = vsel %vm581, %v526, %v614
      %v647 = vsel %vm582, %v529, %v615
      %v648 = vsel %vm583, %v534, %v616
      %v649 = vsel %vm584, %v537, %v617
      %v650 = vsel %vm585, %v542, %v618
      %v651 = vsel %vm586, %v545, %v619
      %v652 = vsel %vm587, %v550, %v620
      %v653 = vsel %vm588, %v553, %v621
      %vm654 = vcmask 261120
      %655 = vst.msk [vmem:[%s200] sm:$0xff] %vm654, %v622
      %656 = vst.msk [vmem:[%s200 + $0x8] sm:$0xff] %vm654, %v623
      %657 = vst.msk [vmem:[%s200 + $0x10] sm:$0xff] %vm654, %v624
      %658 = vst.msk [vmem:[%s200 + $0x18] sm:$0xff] %vm654, %v625
      %659 = vst.msk [vmem:[%s200 + $0x20] sm:$0xff] %vm654, %v626
      %660 = vst.msk [vmem:[%s200 + $0x28] sm:$0xff] %vm654, %v627
      %661 = vst.msk [vmem:[%s200 + $0x30] sm:$0xff] %vm654, %v628
      %662 = vst.msk [vmem:[%s200 + $0x38] sm:$0xff] %vm654, %v629
      %663 = vst.msk [vmem:[%s200 + $0x40] sm:$0xff] %vm654, %v630
      %664 = vst.msk [vmem:[%s200 + $0x48] sm:$0xff] %vm654, %v631
      %665 = vst.msk [vmem:[%s200 + $0x50] sm:$0xff] %vm654, %v632
      %666 = vst.msk [vmem:[%s200 + $0x58] sm:$0xff] %vm654, %v633
      %667 = vst.msk [vmem:[%s200 + $0x60] sm:$0xff] %vm654, %v634
      %668 = vst.msk [vmem:[%s200 + $0x68] sm:$0xff] %vm654, %v635
      %669 = vst.msk [vmem:[%s200 + $0x70] sm:$0xff] %vm654, %v636
      %670 = vst.msk [vmem:[%s200 + $0x78] sm:$0xff] %vm654, %v637
      %671 = vst.msk [vmem:[%s200 + $0x80] sm:$0xff] %vm654, %v638
      %672 = vst.msk [vmem:[%s200 + $0x88] sm:$0xff] %vm654, %v639
      %673 = vst.msk [vmem:[%s200 + $0x90] sm:$0xff] %vm654, %v640
      %674 = vst.msk [vmem:[%s200 + $0x98] sm:$0xff] %vm654, %v641
      %675 = vst.msk [vmem:[%s200 + $0xa0] sm:$0xff] %vm654, %v642
      %676 = vst.msk [vmem:[%s200 + $0xa8] sm:$0xff] %vm654, %v643
      %677 = vst.msk [vmem:[%s200 + $0xb0] sm:$0xff] %vm654, %v644
      %678 = vst.msk [vmem:[%s200 + $0xb8] sm:$0xff] %vm654, %v645
      %679 = vst.msk [vmem:[%s200 + $0xc0] sm:$0xff] %vm654, %v646
      %680 = vst.msk [vmem:[%s200 + $0xc8] sm:$0xff] %vm654, %v647
      %681 = vst.msk [vmem:[%s200 + $0xd0] sm:$0xff] %vm654, %v648
      %682 = vst.msk [vmem:[%s200 + $0xd8] sm:$0xff] %vm654, %v649
      %683 = vst.msk [vmem:[%s200 + $0xe0] sm:$0xff] %vm654, %v650
      %684 = vst.msk [vmem:[%s200 + $0xe8] sm:$0xff] %vm654, %v651
      %685 = vst.msk [vmem:[%s200 + $0xf0] sm:$0xff] %vm654, %v652
      %686 = vst.msk [vmem:[%s200 + $0xf8] sm:$0xff] %vm654, %v653
      %s687 = smul.u32 32, %s16
      %p688 = scmp.lt.s32.totalorder %s687, 63
      %s689 = scalar_select %p688, %s687, 63
      %s690 = smul.addr %s689, 8
      %s691 = scalar_lea.vmem %s4, %s690
      // Predicated region
      $region37: #{tpu_custom_call.1} parent=35 // pred_check
        %p692 = pneg %p123
      $region38: #{tpu_custom_call.1} parent=35 // pred_check_branch
        %694 = sbr.rel (%p692) target = $region40
      $region39: #{tpu_custom_call.1} parent=35 // pred_region
        %s695 = smul.u32 32, %s16
      $region40: #{tpu_custom_call.1} parent=35 // pred_fallthru
        _
    $region36: #{tpu_custom_call.1} parent=5 // pred_fallthru
      _
    %p696 = scmp.le.s32.totalorder 2, %s11
    // Predicated region
    $region41: #{tpu_custom_call.1} parent=5 // pred_check
      %p697 = pneg %p696
    $region42: #{tpu_custom_call.1} parent=5 // pred_check_branch
      %699 = sbr.rel (%p697) target = $region44
    $region43: #{tpu_custom_call.1} parent=5 // pred_region
      %s700 = ssub.s32 %s11, 2
      // Predicated region
      $region45: #{tpu_custom_call.1} parent=43 // pred_check
        %p701 = pneg %p129
      $region46: #{tpu_custom_call.1} parent=43 // pred_check_branch
        %703 = sbr.rel (%p701) target = $region48
      $region47: #{tpu_custom_call.1} parent=43 // pred_region
        %s704 = smul.u32 32, %s17
        %p705 = scmp.lt.s32.totalorder %s704, 63
        %s706 = scalar_select %p705, %s704, 63
        %s707 = smul.addr %s706, 8
        %s708 = scalar_lea.vmem %s4, %s707
      $region48: #{tpu_custom_call.1} parent=43 // pred_fallthru
        _
    $region44: #{tpu_custom_call.1} parent=5 // pred_fallthru
      _
  $region6: #{tpu_custom_call.1} parent=0 // loop_footer
    %s15 = sadd.s32 1, %s11
  $region7: #{tpu_custom_call.1} parent=0 // loop_footer_branch
    %10 = sbr.rel target = $region3
  $region8: #{tpu_custom_call.1} parent=0 // loop_exit
    _

</llo_original>
